<compile_context>
chip_gen: v5e
topology: v5e:2x2
jax: 0.10.0
libtpu: 0.0.40
codegen_flags: <defaults>
</compile_context>

<pallas_src>
import functools

import jax
import jax.numpy as jnp
from jax.experimental import pallas as pl
from jax.experimental.pallas import tpu as pltpu

_MIB = 1024 * 1024
_LANE = 128
# Largest single-tile batch handled by the no-grid path; beyond this we tile the
# batch axis so x/out DMAs pipeline against MXU compute.
_SMALL_BATCH_MAX = 1024
# Candidate batch tiles for the grid path (largest first: per-step overhead ~0.35 us).
_TB_CANDIDATES = (2048, 1024, 512, 256)

# Flipped to False at runtime if this jax build rejects pl.Buffered(1).
_SINGLE_BUFFER_OK = True


def mlp_kernel(x_ref, w1_ref, b1_ref, w2_ref, b2_ref, o_ref):
    """out = relu(x @ W1 + b1) @ W2 + b2 with f32 accumulation."""
    x = x_ref[...]
    # fc1: MXU matmul; cast only the MXU operand to the weight dtype
    # (no-op for f32 / for bf16-in bf16-weights; feeds the bf16 MXU path directly).
    h = jnp.dot(x.astype(w1_ref.dtype), w1_ref[...],
                preferred_element_type=jnp.float32)
    # Bias add + ReLU stay in f32 (VPU; v5e has no bf16 VPU path).
    h = h + b1_ref[...].astype(jnp.float32)
    h = jnp.maximum(h, 0.0)
    # fc2: cast once, only as the MXU input; accumulate in f32.
    out = jnp.dot(h.astype(w2_ref.dtype), w2_ref[...],
                  preferred_element_type=jnp.float32)
    out = out + b2_ref[...].astype(jnp.float32)
    o_ref[...] = out.astype(o_ref.dtype)


@functools.lru_cache(maxsize=1)
def _vmem_budget_bytes():
    """Usable scoped-VMEM budget (physical capacity minus headroom)."""
    try:
        phys = int(pltpu.get_tpu_info().vmem_capacity_bytes)
    except Exception:
        phys = 64 * _MIB  # conservative default (v7x per-TensorCore VMEM)
    return int(phys * 0.9)


def _weights_bytes(input_size, hidden, nc_pad, w1_dt, b1_dt, w2_dt, b2_dt):
    return (input_size * hidden * jnp.dtype(w1_dt).itemsize
            + hidden * jnp.dtype(b1_dt).itemsize
            + hidden * nc_pad * jnp.dtype(w2_dt).itemsize
            + nc_pad * jnp.dtype(b2_dt).itemsize)


def _small_footprint(batch, input_size, hidden, nc_pad, dtypes, out_dt):
    x_dt, w1_dt, b1_dt, w2_dt, b2_dt = dtypes
    return (batch * input_size * jnp.dtype(x_dt).itemsize
            + _weights_bytes(input_size, hidden, nc_pad, w1_dt, b1_dt, w2_dt, b2_dt)
            + batch * nc_pad * jnp.dtype(out_dt).itemsize
            + batch * hidden * 4)  # f32 intermediate h materialized in VMEM


def _grid_footprint(tb, input_size, hidden, nc_pad, dtypes, out_dt, weight_bufs):
    x_dt, w1_dt, b1_dt, w2_dt, b2_dt = dtypes
    return (2 * tb * input_size * jnp.dtype(x_dt).itemsize              # double-buffered x
            + weight_bufs * _weights_bytes(input_size, hidden, nc_pad,
                                           w1_dt, b1_dt, w2_dt, b2_dt)  # resident weights
            + 2 * tb * nc_pad * jnp.dtype(out_dt).itemsize              # double-buffered out
            + tb * hidden * 4)                                          # f32 intermediate h


def _cost_estimate(batch, input_size, hidden, nc_pad, dtypes, out_dt):
    flops = 2 * batch * (input_size * hidden + hidden * nc_pad)
    x_dt, w1_dt, b1_dt, w2_dt, b2_dt = dtypes
    bytes_accessed = (
        batch * input_size * jnp.dtype(x_dt).itemsize
        + _weights_bytes(input_size, hidden, nc_pad, w1_dt, b1_dt, w2_dt, b2_dt)
        + batch * nc_pad * jnp.dtype(out_dt).itemsize)
    return pl.CostEstimate(flops=flops, transcendentals=0,
                           bytes_accessed=bytes_accessed)


@functools.partial(jax.jit, static_argnames=("num_classes", "vmem_limit_bytes"))
def _forward_small(x, w1, b1, w2p, b2p, *, num_classes, vmem_limit_bytes):
    """No-grid path: everything VMEM-resident, zero pipeline overhead."""
    batch, input_size = x.shape
    hidden = w1.shape[1]
    nc_pad = w2p.shape[1]
    dtypes = (x.dtype, w1.dtype, b1.dtype, w2p.dtype, b2p.dtype)
    out = pl.pallas_call(
        mlp_kernel,
        out_shape=jax.ShapeDtypeStruct((batch, nc_pad), x.dtype),
        in_specs=[pl.BlockSpec(memory_space=pltpu.MemorySpace.VMEM)] * 5,
        out_specs=pl.BlockSpec(memory_space=pltpu.MemorySpace.VMEM),
        compiler_params=pltpu.CompilerParams(vmem_limit_bytes=vmem_limit_bytes),
        cost_estimate=_cost_estimate(batch, input_size, hidden, nc_pad,
                                     dtypes, x.dtype),
    )(x, w1, b1, w2p, b2p)
    return out[:, :num_classes]


@functools.partial(jax.jit, static_argnames=("num_classes", "tb",
                                              "single_buffer_weights",
                                              "vmem_limit_bytes"))
def _forward_grid(x, w1, b1, w2p, b2p, *, num_classes, tb,
                  single_buffer_weights, vmem_limit_bytes):
    """Batch-tiled path: weights VMEM-resident, batch axis parallel (megacore)."""
    batch, input_size = x.shape
    hidden = w1.shape[1]
    nc_pad = w2p.shape[1]
    dtypes = (x.dtype, w1.dtype, b1.dtype, w2p.dtype, b2p.dtype)

    def const_spec(shape):
        # Loop-invariant operand: constant block index -> fetched once.
        # Single-buffered so default pipelining does not double the resident
        # weight footprint (matters most on v7x's 64 MiB VMEM).
        if single_buffer_weights:
            return pl.BlockSpec(shape, lambda i: (0, 0),
                                pipeline_mode=pl.Buffered(1))
        return pl.BlockSpec(shape, lambda i: (0, 0))

    out = pl.pallas_call(
        mlp_kernel,
        out_shape=jax.ShapeDtypeStruct((batch, nc_pad), x.dtype),
        grid=(pl.cdiv(batch, tb),),
        in_specs=[
            pl.BlockSpec((tb, input_size), lambda i: (i, 0)),   # streamed x tile
            const_spec((input_size, hidden)),
            const_spec((1, hidden)),
            const_spec((hidden, nc_pad)),
            const_spec((1, nc_pad)),
        ],
        out_specs=pl.BlockSpec((tb, nc_pad), lambda i: (i, 0)),  # lane-dense store
        compiler_params=pltpu.CompilerParams(
            dimension_semantics=("parallel",),  # megacore split on v7x; free elsewhere
            vmem_limit_bytes=vmem_limit_bytes),
        cost_estimate=_cost_estimate(batch, input_size, hidden, nc_pad,
                                     dtypes, x.dtype),
    )(x, w1, b1, w2p, b2p)
    return out[:, :num_classes]


def prepare_params(w1, b1, w2, b2):
    """One-time param prep (hoisted out of the forward path): lane-pad the fc2
    output dim to a multiple of 128 so the kernel's output store is lane-dense."""
    num_classes = w2.shape[1]
    nc_pad = ((num_classes + _LANE - 1) // _LANE) * _LANE
    # TODO(synk): on v6e/v7x (2x256x256 MXU) choosing input_size/hidden as
    # multiples of 256 improves MXU utilization; that is a model-dim choice and
    # is not forced here.
    if nc_pad != num_classes:
        w2 = jnp.pad(w2, ((0, 0), (0, nc_pad - num_classes)))
        b2 = jnp.pad(b2, ((0, 0), (0, nc_pad - num_classes)))
    return w1, b1, w2, b2, num_classes


def neural_net_forward(x, w1, b1, w2p, b2p, num_classes):
    """Pallas implementation of NeuralNet.forward: fc2(relu(fc1(x))).

    Expects W2/b2 already lane-padded via prepare_params (padding hoisted out of
    the per-call path). Returns (batch, num_classes) in x.dtype.
    """
    global _SINGLE_BUFFER_OK
    batch, input_size = x.shape
    hidden = w1.shape[1]
    nc_pad = w2p.shape[1]
    dtypes = (x.dtype, w1.dtype, b1.dtype, w2p.dtype, b2p.dtype)
    budget = _vmem_budget_bytes()

    # ---- small path: gated on actual VMEM footprint, not just batch size ----
    small_fp = _small_footprint(batch, input_size, hidden, nc_pad, dtypes, x.dtype)
    if batch <= _SMALL_BATCH_MAX and int(small_fp * 1.2) + _MIB <= budget:
        limit = min(budget, max(16 * _MIB, int(small_fp * 1.2) + _MIB))
        return _forward_small(x, w1, b1, w2p, b2p,
                              num_classes=num_classes, vmem_limit_bytes=limit)

    # ---- grid path: derive the largest batch tile that fits the VMEM budget ----
    weight_bufs = 1 if _SINGLE_BUFFER_OK else 2

    def fits(cand_tb):
        fp = _grid_footprint(cand_tb, input_size, hidden, nc_pad, dtypes,
                             x.dtype, weight_bufs)
        return int(fp * 1.2) + _MIB <= budget

    tb = None
    for cand in _TB_CANDIDATES:
        if fits(cand):
            tb = cand
            break
    if tb is None:
        # TODO(synk): K-tile fc2 (chunk `hidden` with an f32 accumulator) so the
        # live (tb, hidden) intermediate shrinks when hidden/weights are too
        # large for VMEM; for now fall back to the smallest tile.
        tb = _TB_CANDIDATES[-1]
    # Prefer an even grid length (balanced v7x megacore work) when a smaller
    # fitting tile provides one.
    steps = pl.cdiv(batch, tb)
    if steps > 1 and steps % 2 == 1:
        for cand in _TB_CANDIDATES:
            if cand < tb and fits(cand) and pl.cdiv(batch, cand) % 2 == 0:
                tb = cand
                break

    fp = _grid_footprint(tb, input_size, hidden, nc_pad, dtypes, x.dtype, weight_bufs)
    limit = min(budget, max(16 * _MIB, int(fp * 1.2) + _MIB))

    if _SINGLE_BUFFER_OK:
        try:
            return _forward_grid(x, w1, b1, w2p, b2p, num_classes=num_classes,
                                 tb=tb, single_buffer_weights=True,
                                 vmem_limit_bytes=limit)
        except Exception:
            # pl.Buffered(1) not accepted by this jax/Mosaic build; fall back to
            # default (double-buffered) pipelining for the invariant weights.
            _SINGLE_BUFFER_OK = False
    fp = _grid_footprint(tb, input_size, hidden, nc_pad, dtypes, x.dtype, 2)
    limit = min(budget, max(16 * _MIB, int(fp * 1.2) + _MIB))
    return _forward_grid(x, w1, b1, w2p, b2p, num_classes=num_classes,
                         tb=tb, single_buffer_weights=False,
                         vmem_limit_bytes=limit)


def init_params(key, input_size, hidden_size, num_classes, dtype=jnp.float32):
    """Deterministic init mimicking nn.Linear's U(-1/sqrt(fan_in), +1/sqrt(fan_in))."""
    k1, k2, k3, k4 = jax.random.split(key, 4)
    lim1 = 1.0 / jnp.sqrt(jnp.array(input_size, dtype))
    lim2 = 1.0 / jnp.sqrt(jnp.array(hidden_size, dtype))
    w1 = jax.random.uniform(k1, (input_size, hidden_size), dtype, -lim1, lim1)
    b1 = jax.random.uniform(k2, (1, hidden_size), dtype, -lim1, lim1)
    w2 = jax.random.uniform(k3, (hidden_size, num_classes), dtype, -lim2, lim2)
    b2 = jax.random.uniform(k4, (1, num_classes), dtype, -lim2, lim2)
    return w1, b1, w2, b2


def _reference(x, w1, b1, w2, b2):
    """Pure-JAX reference matching the kernel's precision policy."""
    h = jnp.dot(x.astype(w1.dtype), w1, preferred_element_type=jnp.float32)
    h = jnp.maximum(h + b1.astype(jnp.float32), 0.0)
    out = jnp.dot(h.astype(w2.dtype), w2, preferred_element_type=jnp.float32)
    out = out + b2.astype(jnp.float32)
    return out.astype(x.dtype)


if __name__ == "__main__":
    key = jax.random.PRNGKey(0)
    kx, kp, kx2, kp2 = jax.random.split(key, 4)

    # --- 1) Toy module sizes (f32): small footprint-gated no-grid path.
    batch, input_size, hidden_size, num_classes = 8, 16, 32, 4
    x = jax.random.normal(kx, (batch, input_size), jnp.float32)
    w1, b1, w2, b2 = init_params(kp, input_size, hidden_size, num_classes)
    w1p, b1p, w2p, b2p, nc = prepare_params(w1, b1, w2, b2)   # padding done ONCE

    out = jax.block_until_ready(neural_net_forward(x, w1p, b1p, w2p, b2p, nc))
    ref = _reference(x, w1, b1, w2, b2)
    assert out.shape == (batch, num_classes)
    assert jnp.allclose(out, ref, atol=1e-5, rtol=1e-5)

    # --- 2) bf16 activations + bf16 weights (v6e/v7x advice: keep x bf16 so the
    #        per-tile cast is a no-op and x HBM traffic halves); f32 accumulate.
    xb = x.astype(jnp.bfloat16)
    w1b, b1b, w2b, b2b = (p.astype(jnp.bfloat16) for p in (w1, b1, w2, b2))
    w1bp, b1bp, w2bp, b2bp, ncb = prepare_params(w1b, b1b, w2b, b2b)
    out_bf16 = jax.block_until_ready(
        neural_net_forward(xb, w1bp, b1bp, w2bp, b2bp, ncb))
    ref_bf16 = _reference(xb, w1b, b1b, w2b, b2b)
    assert out_bf16.shape == (batch, num_classes)
    assert jnp.allclose(out_bf16.astype(jnp.float32), ref_bf16.astype(jnp.float32),
                        atol=2e-2, rtol=2e-2)

    # --- 3) Batch-tiled path: VMEM-budget-derived tile, single-buffered weights,
    #        lane-dense output stores, parallel batch axis.
    batch2, input2, hidden2, classes2 = 4096, 256, 512, 10
    x2 = jax.random.normal(kx2, (batch2, input2), jnp.float32)
    w1_2, b1_2, w2_2, b2_2 = init_params(kp2, input2, hidden2, classes2)
    w1_2p, b1_2p, w2_2p, b2_2p, nc2 = prepare_params(w1_2, b1_2, w2_2, b2_2)

    out2 = jax.block_until_ready(
        neural_net_forward(x2, w1_2p, b1_2p, w2_2p, b2_2p, nc2))
    ref2 = _reference(x2, w1_2, b1_2, w2_2, b2_2)
    assert out2.shape == (batch2, classes2)
    assert jnp.allclose(out2, ref2, atol=1e-3, rtol=1e-3)

    print("KERNEL_OK")
</pallas_src>

<mosaic_0001>
module attributes {stable_mosaic.version = 11 : i64} {
  func.func @mlp_kernel(%arg0: memref<8x16xf32, #tpu.memory_space<vmem>>, %arg1: memref<16x32xf32, #tpu.memory_space<vmem>>, %arg2: memref<1x32xf32, #tpu.memory_space<vmem>>, %arg3: memref<32x128xf32, #tpu.memory_space<vmem>>, %arg4: memref<1x128xf32, #tpu.memory_space<vmem>>, %arg5: memref<8x128xf32, #tpu.memory_space<vmem>>) attributes {dimension_semantics = [], scalar_prefetch = 0 : i64, scratch_operands = 0 : i64, tpu.core_type = #tpu.core_type<tc>} {
    %c0 = arith.constant 0 : index
    %c0_0 = arith.constant 0 : index
    %0 = vector.load %arg0[%c0, %c0_0] : memref<8x16xf32, #tpu.memory_space<vmem>>, vector<8x16xf32>
    %c0_1 = arith.constant 0 : index
    %c0_2 = arith.constant 0 : index
    %1 = vector.load %arg1[%c0_1, %c0_2] : memref<16x32xf32, #tpu.memory_space<vmem>>, vector<16x32xf32>
    %cst = arith.constant dense<0.000000e+00> : vector<8x32xf32>
    %2 = tpu.matmul %0, %1, %cst {dimension_numbers = #tpu.dot_dimension_numbers<[1], [0], [0], [1], [0, 0, 1, 1], [], []>} : vector<8x16xf32>, vector<16x32xf32>, vector<8x32xf32> -> vector<8x32xf32>
    %c0_3 = arith.constant 0 : index
    %c0_4 = arith.constant 0 : index
    %3 = vector.load %arg2[%c0_3, %c0_4] : memref<1x32xf32, #tpu.memory_space<vmem>>, vector<1x32xf32>
    %4 = vector.broadcast %3 : vector<1x32xf32> to vector<8x32xf32>
    %5 = arith.addf %2, %4 : vector<8x32xf32>
    %cst_5 = arith.constant 0.000000e+00 : f32
    %6 = vector.broadcast %cst_5 : f32 to vector<8x32xf32>
    %7 = arith.maximumf %5, %6 : vector<8x32xf32>
    %c0_6 = arith.constant 0 : index
    %c0_7 = arith.constant 0 : index
    %8 = vector.load %arg3[%c0_6, %c0_7] : memref<32x128xf32, #tpu.memory_space<vmem>>, vector<32x128xf32>
    %cst_8 = arith.constant dense<0.000000e+00> : vector<8x128xf32>
    %9 = tpu.matmul %7, %8, %cst_8 {dimension_numbers = #tpu.dot_dimension_numbers<[1], [0], [0], [1], [0, 0, 1, 1], [], []>} : vector<8x32xf32>, vector<32x128xf32>, vector<8x128xf32> -> vector<8x128xf32>
    %c0_9 = arith.constant 0 : index
    %c0_10 = arith.constant 0 : index
    %10 = vector.load %arg4[%c0_9, %c0_10] : memref<1x128xf32, #tpu.memory_space<vmem>>, vector<1x128xf32>
    %11 = vector.broadcast %10 : vector<1x128xf32> to vector<8x128xf32>
    %12 = arith.addf %9, %11 : vector<8x128xf32>
    %c0_11 = arith.constant 0 : index
    %c0_12 = arith.constant 0 : index
    %13 = vector.load %arg5[%c0_11, %c0_12] : memref<8x128xf32, #tpu.memory_space<vmem>>, vector<8x128xf32>
    tpu.vector_store %arg5[%c0_11, %c0_12], %12 {strides = array<i32>} : memref<8x128xf32, #tpu.memory_space<vmem>>, vector<8x128xf32>,
    return
  }
}

</mosaic_0001>

<llo_original>
// kernel: _forward_small.1
$region0: #{_forward_small.1}
  #allocation0 [shape = 'u32[]', space=smem, size = 0x4, offset = 0x4, fixed_abs, tag = 'smem constant byte address 0x4 - core index']
  #allocation1 [shape = 'u32[72,128]{1,0:T(1,128)}', space=vmem, size = 0x9000, scoped, tag = 'internal scratch']
  %s0 = inlined_call_operand.hbm [shape: f32[8,16], index: 0, kind: input, shape index: {}]
  %s1 = inlined_call_operand.hbm [shape: f32[16,32], index: 1, kind: input, shape index: {}]
  %s2 = inlined_call_operand.vmem [shape: f32[1,32], index: 2, kind: input, shape index: {}]
  %s3 = inlined_call_operand.hbm [shape: f32[32,128], index: 3, kind: input, shape index: {}]
  %s4 = inlined_call_operand.vmem [shape: f32[1,128], index: 4, kind: input, shape index: {}]
  %s5 = inlined_call_operand.vmem [shape: f32[8,128], index: 5, kind: output, shape index: {}]
  %s6 = sld [smem:[#allocation0]]
  $region42: #{_forward_small.1} parent=0
    _
  %s8 = ssub.s32 1, %s6
  %s9 = scalar_select 0, %s8, %s6
  $region1: #{_forward_small.1} parent=0
    #allocation2 [shape = 'u8[4096]{0}', space=vmem, size = 0x1000, scoped, tag = 'input window, operand 0, single buffered']
    #allocation3 [shape = 's32[1]{0}', space=sflag, size = 0x4, scoped, tag = 'scoped memory for _forward_small.1']
    #allocation4 [shape = 'u8[8192]{0}', space=vmem, size = 0x2000, scoped, tag = 'input window, operand 1, single buffered']
    #allocation5 [shape = 's32[1]{0}', space=sflag, size = 0x4, scoped, tag = 'scoped memory for _forward_small.1']
    #allocation6 [shape = 'u8[16384]{0}', space=vmem, size = 0x4000, scoped, tag = 'input window, operand 3, single buffered']
    %10 = vsyncpa [#allocation3], 0
    %11 = vsyncpa [#allocation5], 0
    // Predicated region
    $region2: #{_forward_small.1} parent=1 // pred_check
      _
    $region3: #{_forward_small.1} parent=1 // pred_check_branch
      %13 = sbr.rel (0) target = $region5
    $region4: #{_forward_small.1} parent=1 // pred_region
      %15 = vsyncadd [#allocation3], 0
      %s17 = sshll.u32 %s0, 4
      %s18 = int_to_ptr.hbm [resolvable:$true] %s17
      %s19 = sshll.u32 [#allocation2], 4
      %s20 = int_to_ptr.vmem [resolvable:$true] %s19
      %22 = dma.hbm_to_vmem [thread:$0]  %s18, 128, %s20, [#allocation3]
    $region5: #{_forward_small.1} parent=1 // pred_fallthru
      _
    // Predicated region
    $region6: #{_forward_small.1} parent=1 // pred_check
      _
    $region7: #{_forward_small.1} parent=1 // pred_check_branch
      %24 = sbr.rel (0) target = $region9
    $region8: #{_forward_small.1} parent=1 // pred_region
      %26 = vsyncadd [#allocation5], 0
      %s27 = sshll.u32 %s1, 4
      %s28 = int_to_ptr.hbm [resolvable:$true] %s27
      %s29 = sshll.u32 [#allocation4], 4
      %s30 = int_to_ptr.vmem [resolvable:$true] %s29
      %35 = dma.hbm_to_vmem [thread:$0]  %s28, 256, %s30, [#allocation5], 128, 128, 8
    $region9: #{_forward_small.1} parent=1 // pred_fallthru
      _
    // Predicated region
    $region10: #{_forward_small.1} parent=1 // pred_check
      _
    $region11: #{_forward_small.1} parent=1 // pred_check_branch
      %37 = sbr.rel (0) target = $region13
    $region12: #{_forward_small.1} parent=1 // pred_region
      _
    $region13: #{_forward_small.1} parent=1 // pred_fallthru
      _
    // Predicated region
    $region14: #{_forward_small.1} parent=1 // pred_check
      _
    $region15: #{_forward_small.1} parent=1 // pred_check_branch
      %39 = sbr.rel (0) target = $region17
    $region16: #{_forward_small.1} parent=1 // pred_region
      %41 = vsyncadd [#allocation5], 0
      %s42 = sshll.u32 %s3, 4
      %s43 = int_to_ptr.hbm [resolvable:$true] %s42
      %s44 = sshll.u32 [#allocation6], 4
      %s45 = int_to_ptr.vmem [resolvable:$true] %s44
      %50 = dma.hbm_to_vmem [thread:$0]  %s43, 512, %s45, [#allocation5], 128, 128, 8
    $region17: #{_forward_small.1} parent=1 // pred_fallthru
      _
    // Predicated region
    $region18: #{_forward_small.1} parent=1 // pred_check
      _
    $region19: #{_forward_small.1} parent=1 // pred_check_branch
      %52 = sbr.rel (0) target = $region21
    $region20: #{_forward_small.1} parent=1 // pred_region
      _
    $region21: #{_forward_small.1} parent=1 // pred_fallthru
      _
    // Predicated region
    $region22: #{_forward_small.1} parent=1 // pred_check
      _
    $region23: #{_forward_small.1} parent=1 // pred_check_branch
      %54 = sbr.rel (0) target = $region25
    $region24: #{_forward_small.1} parent=1 // pred_region
      %56 = dma.done [#allocation3], 128
    $region25: #{_forward_small.1} parent=1 // pred_fallthru
      _
    // Predicated region
    $region26: #{_forward_small.1} parent=1 // pred_check
      _
    $region27: #{_forward_small.1} parent=1 // pred_check_branch
      %58 = sbr.rel (0) target = $region29
    $region28: #{_forward_small.1} parent=1 // pred_region
      %60 = dma.done [#allocation5], 256
    $region29: #{_forward_small.1} parent=1 // pred_fallthru
      _
    // Predicated region
    $region30: #{_forward_small.1} parent=1 // pred_check
      _
    $region31: #{_forward_small.1} parent=1 // pred_check_branch
      %62 = sbr.rel (0) target = $region33
    $region32: #{_forward_small.1} parent=1 // pred_region
      %64 = dma.done [#allocation5], 512
    $region33: #{_forward_small.1} parent=1 // pred_fallthru
      _
    %v65 = vld [vmem:[#allocation2] sm:$0xff]
    %v66 = vld [vmem:[#allocation4] sm:$0xff]
    %v67 = vld [vmem:[#allocation4 + $0x8] sm:$0xff]
    %v68 = vld [vmem:[%s2] sm:$0x1]
    %v70 = vperm.slane %v68, 0
    %vm72 = vcmask 130048
    %v74 = vsel %vm72, %v65, 0
    %76 = vmatpush.msra.mxu0 0.0
    %77 = vmatpush.msra.mxu0 0.0
    %78 = vmatpush.msra.mxu0 0.0
    %79 = vmatpush.msra.mxu0 0.0
    %80 = vmatpush.msra.mxu0 0.0
    %81 = vmatpush.msra.mxu0 0.0
    %82 = vmatpush.msra.mxu0 0.0
    %83 = vmatpush.msra.mxu0 0.0
    %84 = vmatpush.msra.mxu0 0.0
    %85 = vmatpush.msra.mxu0 0.0
    %86 = vmatpush.msra.mxu0 0.0
    %87 = vmatpush.msra.mxu0 0.0
    %88 = vmatpush.msra.mxu0 0.0
    %89 = vmatpush.msra.mxu0 0.0
    %90 = vmatpush.msra.mxu0 %v67
    %91 = vmatpush.msra.mxu0 %v66
    %92 = vmatmul.f32.gmra.mxu0 %v74
    %v93 = vpop.f32.mrf.mxu0
    %v94 = vadd.f32 %v70, %v93
    %95 = vdwg.mxu0
    %v96 = vmax.f32 %v94, 0.0
    %v97 = vld [vmem:[#allocation6] sm:$0xff]
    %v98 = vld [vmem:[#allocation6 + $0x8] sm:$0xff]
    %v99 = vld [vmem:[#allocation6 + $0x10] sm:$0xff]
    %v100 = vld [vmem:[#allocation6 + $0x18] sm:$0xff]
    %v101 = vld [vmem:[%s4] sm:$0x1]
    %v103 = vperm.slane %v101, 0
    %vm105 = vcmask 261120
    %v107 = vsel %vm105, %v96, 0
    %109 = vmatpush.msra.mxu0 0.0
    %110 = vmatpush.msra.mxu0 0.0
    %111 = vmatpush.msra.mxu0 0.0
    %112 = vmatpush.msra.mxu0 0.0
    %113 = vmatpush.msra.mxu0 0.0
    %114 = vmatpush.msra.mxu0 0.0
    %115 = vmatpush.msra.mxu0 0.0
    %116 = vmatpush.msra.mxu0 0.0
    %117 = vmatpush.msra.mxu0 0.0
    %118 = vmatpush.msra.mxu0 0.0
    %119 = vmatpush.msra.mxu0 0.0
    %120 = vmatpush.msra.mxu0 0.0
    %121 = vmatpush.msra.mxu0 %v100
    %122 = vmatpush.msra.mxu0 %v99
    %123 = vmatpush.msra.mxu0 %v98
    %124 = vmatpush.msra.mxu0 %v97
    %125 = vmatmul.f32.gmra.mxu0 %v107
    %v126 = vpop.f32.mrf.mxu0
    %v127 = vadd.f32 %v103, %v126
    %128 = vdwg.mxu0
    %129 = vst [vmem:[%s5] sm:$0xff] %v127
    // Predicated region
    $region34: #{_forward_small.1} parent=1 // pred_check
      _
    $region35: #{_forward_small.1} parent=1 // pred_check_branch
      %131 = sbr.rel (0) target = $region37
    $region36: #{_forward_small.1} parent=1 // pred_region
      _
    $region37: #{_forward_small.1} parent=1 // pred_fallthru
      _
    // Predicated region
    $region38: #{_forward_small.1} parent=1 // pred_check
      _
    $region39: #{_forward_small.1} parent=1 // pred_check_branch
      %133 = sbr.rel (0) target = $region41
    $region40: #{_forward_small.1} parent=1 // pred_region
      _
    $region41: #{_forward_small.1} parent=1 // pred_fallthru
      _
    %134 = vsyncpa [#allocation3], 1
    %135 = vsyncpa [#allocation5], 1

</llo_original>
